<compile_context>
chip_gen: v7x
topology: tpu7x:2x2x1
jax: 0.10.0
libtpu: 0.0.40
codegen_flags: <defaults>
</compile_context>

<pallas_src>
import math
from functools import partial, lru_cache

import numpy as np
import jax
import jax.numpy as jnp
from jax.experimental import pallas as pl
from jax.experimental.pallas import tpu as pltpu


# ----------------------------- hardware awareness -----------------------------

@lru_cache(maxsize=None)
def _vmem_capacity_bytes():
    try:
        return int(pltpu.get_tpu_info().vmem_capacity_bytes)
    except Exception:
        return 64 * 1024 * 1024          # conservative default (v7x physical VMEM)


def _vmem_limit_bytes():
    return int(_vmem_capacity_bytes() * 3 // 4)


def _big_vmem():
    # v5e / v6e have 128 MiB VMEM per core; v7x has 64 MiB.
    return _vmem_capacity_bytes() >= 100 * 1024 * 1024


def _is_bf16(dt):
    return np.dtype(dt) == np.dtype(jnp.bfloat16)


def _itemsize(dt):
    return np.dtype(dt).itemsize


# ----------------------------- in-kernel helpers -------------------------------

def _layernorm(x, w, b, eps=1e-5):
    mu = jnp.mean(x, axis=-1, keepdims=True)
    xc = x - mu
    var = jnp.mean(xc * xc, axis=-1, keepdims=True)
    return xc * jax.lax.rsqrt(var + eps) * w + b


def _gelu_tanh(x):
    c = math.sqrt(2.0 / math.pi)
    return 0.5 * x * (1.0 + jnp.tanh(c * (x + 0.044715 * x * x * x)))


def _pick_tile(dim, preferred, quantum):
    """Largest divisor of `dim` that is <= preferred and a multiple of `quantum`;
    falls back to the full dim (always a legal block size, may be large for
    awkward dims — fine for the shapes used here)."""
    if dim <= preferred:
        return dim
    t = (preferred // quantum) * quantum
    while t >= quantum:
        if dim % t == 0:
            return t
        t -= quantum
    return dim


# --------------------- fused LayerNorm + matmul (+ GELU) -----------------------
# y[i-tile, j-tile] = act( LN(x[i-tile, :]) @ W[:, j-tile] + b[j-tile] )
# LN needs the full feature row, so K (= n_embd) stays resident; LN is computed
# once per row tile (j == 0) into a VMEM scratch and reused for j > 0.

def _ln_matmul_kernel(activation, x_ref, g_ref, b_ref, w_ref, bias_ref,
                      o_ref, h_ref):
    j = pl.program_id(1)

    @pl.when(j == 0)
    def _():
        x = x_ref[...].astype(jnp.float32)
        h = _layernorm(x, g_ref[...].astype(jnp.float32),
                       b_ref[...].astype(jnp.float32))        # f32 elementwise
        h_ref[...] = h.astype(h_ref.dtype)                    # cached for j > 0

    acc = jnp.dot(h_ref[...], w_ref[...], preferred_element_type=jnp.float32)
    acc = acc + bias_ref[...].astype(jnp.float32)
    if activation == "gelu":
        acc = _gelu_tanh(acc)                                 # f32 elementwise
    o_ref[...] = acc.astype(o_ref.dtype)


def ln_matmul(x, gamma, beta, w, bias, activation, compute_dtype):
    M, K = x.shape
    _, N = w.shape
    subq = 16 if _is_bf16(compute_dtype) else 8
    tm = _pick_tile(M, 256, subq)
    tn = _pick_tile(N, 512 if _big_vmem() else 256, 128)
    cost = pl.CostEstimate(
        flops=int(2 * M * K * N),
        transcendentals=int((M * N if activation == "gelu" else 0) + M),
        bytes_accessed=int(M * K * _itemsize(x.dtype) + K * N * _itemsize(w.dtype)
                           + M * N * _itemsize(compute_dtype)))
    return pl.pallas_call(
        partial(_ln_matmul_kernel, activation),
        out_shape=jax.ShapeDtypeStruct((M, N), compute_dtype),
        grid_spec=pltpu.PrefetchScalarGridSpec(
            num_scalar_prefetch=0,
            grid=(M // tm, N // tn),
            in_specs=[pl.BlockSpec((tm, K), lambda i, j: (i, 0)),
                      pl.BlockSpec((1, K), lambda i, j: (0, 0)),
                      pl.BlockSpec((1, K), lambda i, j: (0, 0)),
                      pl.BlockSpec((K, tn), lambda i, j: (0, j)),
                      pl.BlockSpec((1, tn), lambda i, j: (0, j))],
            out_specs=pl.BlockSpec((tm, tn), lambda i, j: (i, j)),
            # LN cache scratch (already compute_dtype -> half VMEM when bf16)
            scratch_shapes=[pltpu.VMEM((tm, K), compute_dtype)]),
        compiler_params=pltpu.CompilerParams(
            # j carries the LN-scratch reuse dependency -> "arbitrary"
            dimension_semantics=("parallel", "arbitrary"),
            vmem_limit_bytes=_vmem_limit_bytes()),
        cost_estimate=cost,
    )(x, gamma, beta, w, bias)


# -------------------- tiled matmul + bias + residual add -----------------------
# out = res + a @ W + b, contraction dim tiled (f32 accumulator, reduction axis
# last, "arbitrary").  Residual stream stays f32; a / W arrive in compute_dtype.

def _matmul_residual_kernel(a_ref, w_ref, bias_ref, res_ref, o_ref, acc_ref):
    k = pl.program_id(2)

    @pl.when(k == 0)
    def _():
        acc_ref[...] = jnp.zeros_like(acc_ref)

    acc_ref[...] += jnp.dot(a_ref[...], w_ref[...],
                            preferred_element_type=jnp.float32)

    @pl.when(k == pl.num_programs(2) - 1)
    def _():
        o_ref[...] = (acc_ref[...] + bias_ref[...].astype(jnp.float32)
                      + res_ref[...].astype(jnp.float32)).astype(o_ref.dtype)


def matmul_bias_residual(a, w, bias, res, compute_dtype):
    M, K = a.shape
    _, N = w.shape
    big = _big_vmem()
    subq = 16 if _is_bf16(compute_dtype) else 8
    tm = _pick_tile(M, 512 if big else 256, subq)
    tn = _pick_tile(N, 1024 if big else 512, 128)
    tk = _pick_tile(K, 512, 128)
    cost = pl.CostEstimate(
        flops=int(2 * M * K * N),
        transcendentals=0,
        bytes_accessed=int(M * K * _itemsize(a.dtype) + K * N * _itemsize(w.dtype)
                           + 2 * M * N * _itemsize(res.dtype)))
    return pl.pallas_call(
        _matmul_residual_kernel,
        out_shape=jax.ShapeDtypeStruct((M, N), res.dtype),
        grid_spec=pltpu.PrefetchScalarGridSpec(
            num_scalar_prefetch=0,
            grid=(M // tm, N // tn, K // tk),
            in_specs=[pl.BlockSpec((tm, tk), lambda i, j, k: (i, k)),
                      pl.BlockSpec((tk, tn), lambda i, j, k: (k, j)),
                      pl.BlockSpec((1, tn), lambda i, j, k: (0, j)),
                      pl.BlockSpec((tm, tn), lambda i, j, k: (i, j))],
            out_specs=pl.BlockSpec((tm, tn), lambda i, j, k: (i, j)),
            scratch_shapes=[pltpu.VMEM((tm, tn), jnp.float32)]),
        compiler_params=pltpu.CompilerParams(
            dimension_semantics=("parallel", "parallel", "arbitrary"),
            vmem_limit_bytes=_vmem_limit_bytes()),
        cost_estimate=cost,
    )(a, w, bias, res)


# -------------------------- flash causal attention ------------------------------
# grid = (B, H, Tq tiles, Tkv tiles); online softmax in f32 scratch.
# Fully masked KV blocks: compute skipped via pl.when AND the K/V index_map is
# clamped so no fresh DMA is issued.  The causal mask is only built on
# diagonal-straddling blocks.

def _flash_attn_kernel(scale, approx_recip, q_ref, k_ref, v_ref, o_ref,
                       m_sc, l_sc, acc_sc):
    qi = pl.program_id(2)
    ki = pl.program_id(3)
    tq = q_ref.shape[2]
    tkv = k_ref.shape[2]

    @pl.when(ki == 0)
    def _():
        m_sc[...] = jnp.full_like(m_sc, -jnp.inf)
        l_sc[...] = jnp.zeros_like(l_sc)
        acc_sc[...] = jnp.zeros_like(acc_sc)

    q_first = qi * tq
    q_last = q_first + (tq - 1)
    kv_first = ki * tkv
    kv_last = kv_first + (tkv - 1)

    def update(apply_mask):
        q = q_ref[0, 0] * scale                               # scale folded into q
        k = k_ref[0, 0]
        v = v_ref[0, 0]
        # contract on head_dim without materializing k.T
        s = jax.lax.dot_general(q, k, (((1,), (1,)), ((), ())),
                                preferred_element_type=jnp.float32)
        if apply_mask:   # only traced into the diagonal-straddling path
            row = q_first + jax.lax.broadcasted_iota(jnp.int32, (tq, tkv), 0)
            col = kv_first + jax.lax.broadcasted_iota(jnp.int32, (tq, tkv), 1)
            s = jnp.where(row >= col, s, -1e30)               # s is f32, stays finite
        m_prev = m_sc[...]
        m_new = jnp.maximum(m_prev, s.max(axis=-1, keepdims=True))
        alpha = jnp.exp(m_prev - m_new)
        p = jnp.exp(s - m_new)
        l_sc[...] = alpha * l_sc[...] + p.sum(axis=-1, keepdims=True)
        acc_sc[...] = alpha * acc_sc[...] + jnp.dot(
            p.astype(v.dtype), v, preferred_element_type=jnp.float32)
        m_sc[...] = m_new

    # Fully unmasked block (entirely at/below the diagonal): no mask VPU work.
    @pl.when(q_first >= kv_last)
    def _():
        update(apply_mask=False)

    # Diagonal-straddling block: build and apply the causal mask.
    @pl.when(jnp.logical_and(q_last >= kv_first, q_first < kv_last))
    def _():
        update(apply_mask=True)

    @pl.when(ki == pl.num_programs(3) - 1)
    def _():
        o_ref[0, 0] = (acc_sc[...] *
                       pl.reciprocal(l_sc[...], approx=approx_recip)
                       ).astype(o_ref.dtype)


def flash_attention(q, k, v, compute_dtype):
    B, H, T, hd = q.shape
    subq = 16 if _is_bf16(compute_dtype) else 8
    tq = _pick_tile(T, 128, subq)
    tkv = _pick_tile(T, 512 if _big_vmem() else 256, subq)
    nq, nkv = T // tq, T // tkv
    scale = 1.0 / math.sqrt(hd)
    approx = _is_bf16(compute_dtype)      # exact reciprocal on the f32 path

    def kv_map(b, h, qi, ki):
        # Clamp fully-masked steps to the last causally-needed block so the
        # block index is unchanged and no new DMA is issued.
        last_needed = ((qi + 1) * tq - 1) // tkv
        return (b, h, jnp.minimum(ki, last_needed), 0)

    cost = pl.CostEstimate(
        flops=int(2 * B * H * T * T * hd),                    # ~causal half of QK+PV
        transcendentals=int(B * H * T * T // 2),
        bytes_accessed=int((3 * B * H * T * hd) * _itemsize(q.dtype)
                           + B * H * T * hd * _itemsize(compute_dtype)))

    return pl.pallas_call(
        partial(_flash_attn_kernel, scale, approx),
        out_shape=jax.ShapeDtypeStruct((B, H, T, hd), compute_dtype),
        grid_spec=pltpu.PrefetchScalarGridSpec(
            num_scalar_prefetch=0,
            grid=(B, H, nq, nkv),
            in_specs=[pl.BlockSpec((1, 1, tq, hd), lambda b, h, qi, ki: (b, h, qi, 0)),
                      pl.BlockSpec((1, 1, tkv, hd), kv_map),
                      pl.BlockSpec((1, 1, tkv, hd), kv_map)],
            out_specs=pl.BlockSpec((1, 1, tq, hd), lambda b, h, qi, ki: (b, h, qi, 0)),
            scratch_shapes=[pltpu.VMEM((tq, 1), jnp.float32),
                            pltpu.VMEM((tq, 1), jnp.float32),
                            pltpu.VMEM((tq, hd), jnp.float32)]),
        compiler_params=pltpu.CompilerParams(
            dimension_semantics=("parallel", "parallel", "parallel", "arbitrary"),
            vmem_limit_bytes=_vmem_limit_bytes()),
        cost_estimate=cost,
    )(q, k, v)


# ------------------------------- Block forward ----------------------------------

def block_forward(x, p, n_head, compute_dtype=jnp.float32):
    """x: (B, T, D).  Mirrors Block.forward: x += attn(ln_1(x)); x += mlp(ln_2(x))."""
    B, T, D = x.shape
    assert D % n_head == 0
    H, hd = n_head, D // n_head
    M = B * T
    x2 = x.reshape(M, D)

    # Pre-cast weights once (halves weight DMA traffic + VMEM when bf16).
    w_attn = p['w_attn'].astype(compute_dtype)
    w_proj = p['w_proj'].astype(compute_dtype)
    w_fc = p['w_fc'].astype(compute_dtype)
    w_mp = p['w_mp'].astype(compute_dtype)

    # ln_1 + c_attn (fused)
    qkv = ln_matmul(x2, p['ln1_g'], p['ln1_b'], w_attn, p['b_attn'],
                    activation=None, compute_dtype=compute_dtype)        # (M, 3D)

    # head split (XLA layout glue; per-head column blocks with hd < 128 are not
    # legal Pallas block shapes, so this stays outside the kernel)
    qkv = qkv.reshape(B, T, 3 * D)
    q = qkv[..., 0:D].reshape(B, T, H, hd).transpose(0, 2, 1, 3)
    k = qkv[..., D:2 * D].reshape(B, T, H, hd).transpose(0, 2, 1, 3)
    v = qkv[..., 2 * D:].reshape(B, T, H, hd).transpose(0, 2, 1, 3)

    y = flash_attention(q, k, v, compute_dtype)                          # (B,H,T,hd)
    y = y.transpose(0, 2, 1, 3).reshape(M, D)

    # attn c_proj + residual (fused, residual stays f32)
    x2 = matmul_bias_residual(y, w_proj, p['b_proj'], x2, compute_dtype)

    # ln_2 + c_fc + GELU (fused)
    ff = ln_matmul(x2, p['ln2_g'], p['ln2_b'], w_fc, p['b_fc'],
                   activation='gelu', compute_dtype=compute_dtype)       # (M, 4D)

    # mlp c_proj + residual (K = 4D tiled with accumulator)
    x2 = matmul_bias_residual(ff, w_mp, p['b_mp'], x2, compute_dtype)

    return x2.reshape(B, T, D)


# ------------------------------ parameter init ----------------------------------
# Weights stored as [in, out] (y = x @ W + b, equivalent to torch x @ W.T + b).

def init_block_params(key, D):
    ks = jax.random.split(key, 10)
    nrm = lambda k, shape, s=0.02: s * jax.random.normal(k, shape, jnp.float32)
    return {
        'ln1_g': 1.0 + 0.1 * jax.random.normal(ks[0], (1, D), jnp.float32),
        'ln1_b': 0.1 * jax.random.normal(ks[1], (1, D), jnp.float32),
        'w_attn': nrm(ks[2], (D, 3 * D)),
        'b_attn': nrm(ks[3], (1, 3 * D), 0.01),
        'w_proj': nrm(ks[4], (D, D)),
        'b_proj': nrm(ks[5], (1, D), 0.01),
        'ln2_g': 1.0 + 0.1 * jax.random.normal(ks[6], (1, D), jnp.float32),
        'ln2_b': 0.1 * jax.random.normal(ks[7], (1, D), jnp.float32),
        'w_fc': nrm(ks[8], (D, 4 * D)),
        'b_fc': jnp.zeros((1, 4 * D), jnp.float32),
        'w_mp': nrm(ks[9], (4 * D, D)),
        'b_mp': jnp.zeros((1, D), jnp.float32),
    }


# ------------------------------ pure-JAX reference -------------------------------

def block_reference(x, p, n_head):
    B, T, D = x.shape
    H, hd = n_head, D // n_head
    h = _layernorm(x, p['ln1_g'], p['ln1_b'])
    qkv = h @ p['w_attn'] + p['b_attn']
    q, k, v = qkv[..., :D], qkv[..., D:2 * D], qkv[..., 2 * D:]
    q = q.reshape(B, T, H, hd).transpose(0, 2, 1, 3)
    k = k.reshape(B, T, H, hd).transpose(0, 2, 1, 3)
    v = v.reshape(B, T, H, hd).transpose(0, 2, 1, 3)
    s = jnp.einsum('bhtd,bhsd->bhts', q, k) / math.sqrt(hd)
    mask = jnp.tril(jnp.ones((T, T), bool))
    s = jnp.where(mask, s, -1e30)
    pa = jax.nn.softmax(s, axis=-1)
    y = jnp.einsum('bhts,bhsd->bhtd', pa, v).transpose(0, 2, 1, 3).reshape(B, T, D)
    x = x + (y @ p['w_proj'] + p['b_proj'])
    h2 = _layernorm(x, p['ln2_g'], p['ln2_b'])
    x = x + (_gelu_tanh(h2 @ p['w_fc'] + p['b_fc']) @ p['w_mp'] + p['b_mp'])
    return x


# ----------------------------------- main ----------------------------------------

if __name__ == "__main__":
    B, T, D, H = 2, 8, 32, 2

    key = jax.random.PRNGKey(0)
    kp, kx = jax.random.split(key)
    params = init_block_params(kp, D)
    x = jax.random.normal(kx, (B, T, D), jnp.float32)

    ref = block_reference(x, params, H)

    # f32 compute path (tight check; exact reciprocal in softmax).
    out_f32 = jax.block_until_ready(block_forward(x, params, H, jnp.float32))
    assert out_f32.shape == (B, T, D)
    err32 = float(jnp.max(jnp.abs(out_f32 - ref)))
    assert jnp.allclose(out_f32, ref, atol=1e-3, rtol=1e-3), f"f32 mismatch {err32}"

    # bf16 MXU-input path (f32 accumulation / residuals); loose check.
    out_bf16 = jax.block_until_ready(block_forward(x, params, H, jnp.bfloat16))
    errbf = float(jnp.max(jnp.abs(out_bf16 - ref)))
    assert jnp.allclose(out_bf16, ref, atol=3e-2, rtol=3e-2), f"bf16 mismatch {errbf}"

    print("KERNEL_OK")
</pallas_src>

<mosaic_0001>
module attributes {stable_mosaic.version = 11 : i64} {
  func.func @_ln_matmul_kernel(%arg0: i32, %arg1: i32, %arg2: memref<16x32xf32, #tpu.memory_space<vmem>>, %arg3: memref<1x32xf32, #tpu.memory_space<vmem>>, %arg4: memref<1x32xf32, #tpu.memory_space<vmem>>, %arg5: memref<32x96xf32, #tpu.memory_space<vmem>>, %arg6: memref<1x96xf32, #tpu.memory_space<vmem>>, %arg7: memref<16x96xf32, #tpu.memory_space<vmem>>, %arg8: memref<16x32xf32, #tpu.memory_space<vmem>>) attributes {dimension_semantics = [#tpu.dimension_semantics<parallel>, #tpu.dimension_semantics<arbitrary>], iteration_bounds = array<i64: 1, 1>, scalar_prefetch = 0 : i64, scratch_operands = 1 : i64, tpu.core_type = #tpu.core_type<tc>, window_params = [{transform_indices = @transform_0, window_bounds = array<i64: 16, 32>}, {pipeline_mode = #tpu.pipeline_mode<synchronous>, transform_indices = @transform_1, window_bounds = array<i64: 1, 32>}, {pipeline_mode = #tpu.pipeline_mode<synchronous>, transform_indices = @transform_2, window_bounds = array<i64: 1, 32>}, {transform_indices = @transform_3, window_bounds = array<i64: 32, 96>}, {transform_indices = @transform_4, window_bounds = array<i64: 1, 96>}, {transform_indices = @transform_5, window_bounds = array<i64: 16, 96>}]} {
    %c0_i32 = arith.constant 0 : i32
    %0 = arith.cmpi eq, %arg1, %c0_i32 : i32
    %1 = arith.extui %0 : i1 to i32
    %c0_i32_0 = arith.constant 0 : i32
    %2 = arith.cmpi ne, %1, %c0_i32_0 : i32
    scf.if %2 {
      %c0_8 = arith.constant 0 : index
      %c0_9 = arith.constant 0 : index
      %10 = vector.load %arg2[%c0_8, %c0_9] : memref<16x32xf32, #tpu.memory_space<vmem>>, vector<16x32xf32>
      %c0_10 = arith.constant 0 : index
      %c0_11 = arith.constant 0 : index
      %11 = vector.load %arg3[%c0_10, %c0_11] : memref<1x32xf32, #tpu.memory_space<vmem>>, vector<1x32xf32>
      %c0_12 = arith.constant 0 : index
      %c0_13 = arith.constant 0 : index
      %12 = vector.load %arg4[%c0_12, %c0_13] : memref<1x32xf32, #tpu.memory_space<vmem>>, vector<1x32xf32>
      %cst_14 = arith.constant dense<0.000000e+00> : vector<16xf32>
      %13 = vector.multi_reduction <add>, %10, %cst_14 [1] : vector<16x32xf32> to vector<16xf32>
      %14 = vector.shape_cast %13 : vector<16xf32> to vector<16x1xf32>
      %cst_15 = arith.constant 3.200000e+01 : f32
      %15 = vector.broadcast %cst_15 : f32 to vector<16x1xf32>
      %16 = arith.divf %14, %15 : vector<16x1xf32>
      %17 = vector.broadcast %16 : vector<16x1xf32> to vector<16x32xf32>
      %18 = arith.subf %10, %17 : vector<16x32xf32>
      %19 = arith.mulf %18, %18 : vector<16x32xf32>
      %cst_16 = arith.constant dense<0.000000e+00> : vector<16xf32>
      %20 = vector.multi_reduction <add>, %19, %cst_16 [1] : vector<16x32xf32> to vector<16xf32>
      %21 = vector.shape_cast %20 : vector<16xf32> to vector<16x1xf32>
      %cst_17 = arith.constant 3.200000e+01 : f32
      %22 = vector.broadcast %cst_17 : f32 to vector<16x1xf32>
      %23 = arith.divf %21, %22 : vector<16x1xf32>
      %cst_18 = arith.constant 9.99999974E-6 : f32
      %24 = vector.broadcast %cst_18 : f32 to vector<16x1xf32>
      %25 = arith.addf %23, %24 : vector<16x1xf32>
      %26 = math.rsqrt %25 : vector<16x1xf32>
      %27 = vector.broadcast %26 : vector<16x1xf32> to vector<16x32xf32>
      %28 = arith.mulf %18, %27 : vector<16x32xf32>
      %29 = vector.broadcast %11 : vector<1x32xf32> to vector<16x32xf32>
      %30 = arith.mulf %28, %29 : vector<16x32xf32>
      %31 = vector.broadcast %12 : vector<1x32xf32> to vector<16x32xf32>
      %32 = arith.addf %30, %31 : vector<16x32xf32>
      %c0_19 = arith.constant 0 : index
      %c0_20 = arith.constant 0 : index
      %33 = vector.load %arg8[%c0_19, %c0_20] : memref<16x32xf32, #tpu.memory_space<vmem>>, vector<16x32xf32>
      tpu.vector_store %arg8[%c0_19, %c0_20], %32 {strides = array<i32>} : memref<16x32xf32, #tpu.memory_space<vmem>>, vector<16x32xf32>,
    } else {
    }
    %c0 = arith.constant 0 : index
    %c0_1 = arith.constant 0 : index
    %3 = vector.load %arg8[%c0, %c0_1] : memref<16x32xf32, #tpu.memory_space<vmem>>, vector<16x32xf32>
    %c0_2 = arith.constant 0 : index
    %c0_3 = arith.constant 0 : index
    %4 = vector.load %arg5[%c0_2, %c0_3] : memref<32x96xf32, #tpu.memory_space<vmem>>, vector<32x96xf32>
    %cst = arith.constant dense<0.000000e+00> : vector<16x96xf32>
    %5 = tpu.matmul %3, %4, %cst {dimension_numbers = #tpu.dot_dimension_numbers<[1], [0], [0], [1], [0, 0, 1, 1], [], []>} : vector<16x32xf32>, vector<32x96xf32>, vector<16x96xf32> -> vector<16x96xf32>
    %c0_4 = arith.constant 0 : index
    %c0_5 = arith.constant 0 : index
    %6 = vector.load %arg6[%c0_4, %c0_5] : memref<1x96xf32, #tpu.memory_space<vmem>>, vector<1x96xf32>
    %7 = vector.broadcast %6 : vector<1x96xf32> to vector<16x96xf32>
    %8 = arith.addf %5, %7 : vector<16x96xf32>
    %c0_6 = arith.constant 0 : index
    %c0_7 = arith.constant 0 : index
    %9 = vector.load %arg7[%c0_6, %c0_7] : memref<16x96xf32, #tpu.memory_space<vmem>>, vector<16x96xf32>
    tpu.vector_store %arg7[%c0_6, %c0_7], %8 {strides = array<i32>} : memref<16x96xf32, #tpu.memory_space<vmem>>, vector<16x96xf32>,
    return
  }
  func.func @transform_0(%arg0: i32, %arg1: i32) -> (i32, i32) {
    %c0_i32 = arith.constant 0 : i32
    %c0_i32_0 = arith.constant 0 : i32
    return %arg0, %c0_i32 : i32, i32
  }
  func.func @transform_1(%arg0: i32, %arg1: i32) -> (i32, i32) {
    %c0_i32 = arith.constant 0 : i32
    %c0_i32_0 = arith.constant 0 : i32
    %c0_i32_1 = arith.constant 0 : i32
    return %c0_i32, %c0_i32_0 : i32, i32
  }
  func.func @transform_2(%arg0: i32, %arg1: i32) -> (i32, i32) {
    %c0_i32 = arith.constant 0 : i32
    %c0_i32_0 = arith.constant 0 : i32
    %c0_i32_1 = arith.constant 0 : i32
    return %c0_i32, %c0_i32_0 : i32, i32
  }
  func.func @transform_3(%arg0: i32, %arg1: i32) -> (i32, i32) {
    %c0_i32 = arith.constant 0 : i32
    %c0_i32_0 = arith.constant 0 : i32
    return %c0_i32, %arg1 : i32, i32
  }
  func.func @transform_4(%arg0: i32, %arg1: i32) -> (i32, i32) {
    %c0_i32 = arith.constant 0 : i32
    %c0_i32_0 = arith.constant 0 : i32
    return %c0_i32, %arg1 : i32, i32
  }
  func.func @transform_5(%arg0: i32, %arg1: i32) -> (i32, i32) {
    %c0_i32 = arith.constant 0 : i32
    return %arg0, %arg1 : i32, i32
  }
}

</mosaic_0001>

<llo_original>
// kernel: tpu_custom_call.1
$region0: #{tpu_custom_call.1}
  #allocation0 [shape = 'u32[]', space=smem, size = 0x4, offset = 0x4, fixed_abs, tag = 'smem constant byte address 0x4 - core index']
  #allocation1 [shape = 'u32[144,128]{1,0:T(1,128)}', space=vmem, size = 0x12000, scoped, tag = 'internal scratch']
  #allocation2 [shape = 'f32[16,32]{1,0:T(8,128)}', space=vmem, size = 0x2000, scoped, tag = 'scratch operand']
  %s0 = inlined_call_operand.hbm [shape: f32[16,32], index: 0, kind: input, shape index: {}]
  %s1 = inlined_call_operand.vmem [shape: f32[1,32], index: 1, kind: input, shape index: {}]
  %s2 = inlined_call_operand.vmem [shape: f32[1,32], index: 2, kind: input, shape index: {}]
  %s3 = inlined_call_operand.hbm [shape: f32[32,96], index: 3, kind: input, shape index: {}]
  %s4 = inlined_call_operand.vmem [shape: f32[1,96], index: 4, kind: input, shape index: {}]
  %s5 = inlined_call_operand.hbm [shape: f32[16,96], index: 5, kind: output, shape index: {}]
  %s6 = sld [smem:[#allocation0]]
  $region42: #{tpu_custom_call.1} parent=0
    _
  %s8 = ssub.s32 1, %s6
  %s9 = scalar_select 0, %s8, %s6
  $region1: #{tpu_custom_call.1} parent=0
    #allocation3 [shape = 'u8[8192]{0}', space=vmem, size = 0x2000, scoped, tag = 'input window, operand 0, single buffered']
    #allocation4 [shape = 's32[1]{0}', space=sflag, size = 0x4, scoped, tag = 'scoped memory for tpu_custom_call.1']
    #allocation5 [shape = 's32[1]{0}', space=sflag, size = 0x4, scoped, tag = 'scoped memory for tpu_custom_call.1']
    #allocation6 [shape = 'u8[16384]{0}', space=vmem, size = 0x4000, scoped, tag = 'input window, operand 3, single buffered']
    #allocation7 [shape = 's32[1]{0}', space=sflag, size = 0x4, scoped, tag = 'scoped memory for tpu_custom_call.1']
    #allocation8 [shape = 'u8[8192]{0}', space=vmem, size = 0x2000, scoped, tag = 'output window, operand 0, single buffered']
    %10 = vsyncpa [#allocation4], 0
    %11 = vsyncpa [#allocation7], 0
    %12 = vsyncpa [#allocation5], 0
    // Predicated region
    $region2: #{tpu_custom_call.1} parent=1 // pred_check
      _
    $region3: #{tpu_custom_call.1} parent=1 // pred_check_branch
      %14 = sbr.rel (0) target = $region5
    $region4: #{tpu_custom_call.1} parent=1 // pred_region
      %s16 = ssub.s32 256, 256
      %17 = vsyncadd [#allocation4], %s16
      %s18 = sshll.u32 [#allocation3], 4
      %s19 = int_to_ptr.vmem [resolvable:$true] %s18
      %24 = dma.hbm_to_vmem [thread:$0]  %s0, 256, %s19, [#allocation4], 128, 128, 8
    $region5: #{tpu_custom_call.1} parent=1 // pred_fallthru
      _
    // Predicated region
    $region6: #{tpu_custom_call.1} parent=1 // pred_check
      _
    $region7: #{tpu_custom_call.1} parent=1 // pred_check_branch
      %26 = sbr.rel (0) target = $region9
    $region8: #{tpu_custom_call.1} parent=1 // pred_region
      _
    $region9: #{tpu_custom_call.1} parent=1 // pred_fallthru
      _
    // Predicated region
    $region10: #{tpu_custom_call.1} parent=1 // pred_check
      _
    $region11: #{tpu_custom_call.1} parent=1 // pred_check_branch
      %28 = sbr.rel (0) target = $region13
    $region12: #{tpu_custom_call.1} parent=1 // pred_region
      _
    $region13: #{tpu_custom_call.1} parent=1 // pred_fallthru
      _
    // Predicated region
    $region14: #{tpu_custom_call.1} parent=1 // pred_check
      _
    $region15: #{tpu_custom_call.1} parent=1 // pred_check_branch
      %30 = sbr.rel (0) target = $region17
    $region16: #{tpu_custom_call.1} parent=1 // pred_region
      %s32 = ssub.s32 512, 512
      %33 = vsyncadd [#allocation7], %s32
      %s34 = sshll.u32 [#allocation6], 4
      %s35 = int_to_ptr.vmem [resolvable:$true] %s34
      %40 = dma.hbm_to_vmem [thread:$0]  %s3, 512, %s35, [#allocation7], 128, 128, 8
    $region17: #{tpu_custom_call.1} parent=1 // pred_fallthru
      _
    // Predicated region
    $region18: #{tpu_custom_call.1} parent=1 // pred_check
      _
    $region19: #{tpu_custom_call.1} parent=1 // pred_check_branch
      %42 = sbr.rel (0) target = $region21
    $region20: #{tpu_custom_call.1} parent=1 // pred_region
      _
    $region21: #{tpu_custom_call.1} parent=1 // pred_fallthru
      _
    // Predicated region
    $region22: #{tpu_custom_call.1} parent=1 // pred_check
      _
    $region23: #{tpu_custom_call.1} parent=1 // pred_check_branch
      %44 = sbr.rel (0) target = $region25
    $region24: #{tpu_custom_call.1} parent=1 // pred_region
      %45 = dma.done [#allocation4], 256
    $region25: #{tpu_custom_call.1} parent=1 // pred_fallthru
      _
    // Predicated region
    $region26: #{tpu_custom_call.1} parent=1 // pred_check
      _
    $region27: #{tpu_custom_call.1} parent=1 // pred_check_branch
      %47 = sbr.rel (0) target = $region29
    $region28: #{tpu_custom_call.1} parent=1 // pred_region
      %48 = dma.done [#allocation7], 512
    $region29: #{tpu_custom_call.1} parent=1 // pred_fallthru
      _
    %p49 = scmp.eq.s32.totalorder 0, 0
    // Predicated region
    $region30: #{tpu_custom_call.1} parent=1 // pred_check
      %p50 = pneg %p49
    $region31: #{tpu_custom_call.1} parent=1 // pred_check_branch
      %52 = sbr.rel (%p50) target = $region33
    $region32: #{tpu_custom_call.1} parent=1 // pred_region
      %v53 = vld [vmem:[#allocation3] sm:$0xff]
      %v54 = vld [vmem:[#allocation3 + $0x8] sm:$0xff]
      %v55 = vld [vmem:[%s1] sm:$0x1]
      %v56 = vld [vmem:[%s2] sm:$0x1]
      %vm57 = vcmask 261120
      %v58 = vsel %vm57, %v53, 0.0
      %59 = vadd.xlane.f32.xlu0 %v58
      %v60 = vpop.xlane.xlu0 %59
      %v61 = vsel %vm57, %v54, 0.0
      %62 = vadd.xlane.f32.xlu0 %v61
      %v63 = vpop.xlane.xlu0 %62
      %v64 = vrcp.pop 32.0
      %v65 = vmul.f32 %v60, %v64
      %v66 = vmul.f32 %v63, %v64
      %v67 = vsub.f32 %v53, %v65
      %v68 = vsub.f32 %v54, %v66
      %v69 = vmul.f32 %v67, %v67
      %v70 = vmul.f32 %v68, %v68
      %v71 = vsel %vm57, %v69, 0.0
      %72 = vadd.xlane.f32.xlu0 %v71
      %v73 = vpop.xlane.xlu0 %72
      %v74 = vsel %vm57, %v70, 0.0
      %75 = vadd.xlane.f32.xlu0 %v74
      %v76 = vpop.xlane.xlu0 %75
      %v77 = vmul.f32 %v73, %v64
      %v78 = vmul.f32 %v76, %v64
      %v79 = vadd.f32 %v77, 1e-05
      %v80 = vadd.f32 %v78, 1e-05
      %v81 = vrsqrt.pop %v79
      %v82 = vrsqrt.pop %v80
      %v83 = vmul.f32 %v67, %v81
      %v84 = vmul.f32 %v68, %v82
      %v86 = vlaneseq
      %v87 = vshrl.u32 %v86, 7
      %v88 = vsub.s32 0, %v87
      %v89 = vrot.slane %v55, %v88
      %v91 = vmul.f32 %v83, %v89
      %v92 = vmul.f32 %v84, %v89
      %v94 = vlaneseq
      %v95 = vshrl.u32 %v94, 7
      %v96 = vsub.s32 0, %v95
      %v97 = vrot.slane %v56, %v96
      %v99 = vadd.f32 %v91, %v97
      %v100 = vadd.f32 %v92, %v97
      %101 = vst.msk [vmem:[#allocation2] sm:$0xff] %vm57, %v99
      %102 = vst.msk [vmem:[#allocation2 + $0x8] sm:$0xff] %vm57, %v100
    $region33: #{tpu_custom_call.1} parent=1 // pred_fallthru
      _
    %v103 = vld [vmem:[#allocation2] sm:$0xff]
    %v104 = vld [vmem:[#allocation2 + $0x8] sm:$0xff]
    %v105 = vld [vmem:[#allocation6] sm:$0xff]
    %v106 = vld [vmem:[#allocation6 + $0x8] sm:$0xff]
    %v107 = vld [vmem:[#allocation6 + $0x10] sm:$0xff]
    %v108 = vld [vmem:[#allocation6 + $0x18] sm:$0xff]
    %v109 = vld [vmem:[%s4] sm:$0x1]
    %v111 = vlaneseq
    %v112 = vshrl.u32 %v111, 7
    %v113 = vsub.s32 0, %v112
    %v114 = vrot.slane %v109, %v113
    %vm116 = vcmask 261120
    %v118 = vsel %vm116, %v103, 0
    %v121 = vsel %vm116, %v104, 0
    %123 = vmatprep.subr.mxu0 0.0
    %124 = vmatpush1.msra.mxu0 %v105
    %125 = vmatprep.subr.mxu0 0.0
    %126 = vmatpush1.msra.mxu0 %v106
    %127 = vmatprep.subr.mxu0 0.0
    %128 = vmatpush1.msra.mxu0 %v107
    %129 = vmatprep.subr.mxu0 0.0
    %130 = vmatpush1.msra.mxu0 %v108
    %131 = vmatprep.subr.mxu0 0.0
    %132 = vmatpush1.msra.mxu0 0.0
    %133 = vmatprep.subr.mxu0 0.0
    %134 = vmatpush1.msra.mxu0 0.0
    %135 = vmatprep.subr.mxu0 0.0
    %136 = vmatpush1.msra.mxu0 0.0
    %137 = vmatprep.subr.mxu0 0.0
    %138 = vmatpush1.msra.mxu0 0.0
    %139 = vmatprep.subr.mxu0 0.0
    %140 = vmatpush1.msra.mxu0 0.0
    %141 = vmatprep.subr.mxu0 0.0
    %142 = vmatpush1.msra.mxu0 0.0
    %143 = vmatprep.subr.mxu0 0.0
    %144 = vmatpush1.msra.mxu0 0.0
    %145 = vmatprep.subr.mxu0 0.0
    %146 = vmatpush1.msra.mxu0 0.0
    %147 = vmatprep.subr.mxu0 0.0
    %148 = vmatpush1.msra.mxu0 0.0
    %149 = vmatprep.subr.mxu0 0.0
    %150 = vmatpush1.msra.mxu0 0.0
    %151 = vmatprep.subr.mxu0 0.0
    %152 = vmatpush1.msra.mxu0 0.0
    %153 = vmatprep.subr.mxu0 0.0
    %154 = vmatpush1.msra.mxu0 0.0
    %155 = vmatprep.subr.mxu0 0.0
    %156 = vmatpush1.msra.mxu0 0.0
    %157 = vmatprep.subr.mxu0 0.0
    %158 = vmatpush1.msra.mxu0 0.0
    %159 = vmatprep.subr.mxu0 0.0
    %160 = vmatpush1.msra.mxu0 0.0
    %161 = vmatprep.subr.mxu0 0.0
    %162 = vmatpush1.msra.mxu0 0.0
    %163 = vmatprep.subr.mxu0 0.0
    %164 = vmatpush1.msra.mxu0 0.0
    %165 = vmatprep.subr.mxu0 0.0
    %166 = vmatpush1.msra.mxu0 0.0
    %167 = vmatprep.subr.mxu0 0.0
    %168 = vmatpush1.msra.mxu0 0.0
    %169 = vmatprep.subr.mxu0 0.0
    %170 = vmatpush1.msra.mxu0 0.0
    %171 = vmatprep.subr.mxu0 0.0
    %172 = vmatpush1.msra.mxu0 0.0
    %173 = vmatprep.subr.mxu0 0.0
    %174 = vmatpush1.msra.mxu0 0.0
    %175 = vmatprep.subr.mxu0 0.0
    %176 = vmatpush1.msra.mxu0 0.0
    %177 = vmatprep.subr.mxu0 0.0
    %178 = vmatpush1.msra.mxu0 0.0
    %179 = vmatprep.subr.mxu0 0.0
    %180 = vmatpush1.msra.mxu0 0.0
    %181 = vmatprep.subr.mxu0 0.0
    %182 = vmatpush1.msra.mxu0 0.0
    %183 = vmatprep.subr.mxu0 0.0
    %184 = vmatpush1.msra.mxu0 0.0
    %185 = vmatprep.subr.mxu0 0.0
    %186 = vmatpush1.msra.mxu0 0.0
    %187 = vmatprep.mubr.f32.mxu0 0.0
    %188 = vmatmul.mubr.f32.gmra.mrb[0].mxu0 %v118
    %v189 = vpop.f32.mrb[0].mxu0
    %v190 = vadd.f32 %v114, %v189
    %v191 = vpop.f32.mrb[0].mxu0
    %192 = vmatprep.mubr.f32.mxu0 0.0
    %193 = vmatmul.mubr.f32.gmra.mrb[0].mxu0 %v121
    %v194 = vpop.f32.mrb[0].mxu0
    %v195 = vadd.f32 %v114, %v194
    %v196 = vpop.f32.mrb[0].mxu0
    %197 = vdwg.mxu0
    %vm198 = vcmask 785408
    %199 = vst.msk [vmem:[#allocation8] sm:$0xff] %vm198, %v190
    %200 = vst.msk [vmem:[#allocation8 + $0x8] sm:$0xff] %vm198, %v195
    // Predicated region
    $region34: #{tpu_custom_call.1} parent=1 // pred_check
      _
    $region35: #{tpu_custom_call.1} parent=1 // pred_check_branch
      %202 = sbr.rel (0) target = $region37
    $region36: #{tpu_custom_call.1} parent=1 // pred_region
      %s204 = ssub.s32 256, 256
      %205 = vsyncadd [#allocation5], %s204
      %s206 = sshll.u32 [#allocation8], 4
      %s207 = int_to_ptr.vmem [resolvable:$true] %s206
      %212 = dma.vmem_to_hbm [thread:$0]  %s207, 256, %s5, [#allocation5], 128, 128, 8
    $region37: #{tpu_custom_call.1} parent=1 // pred_fallthru
      _
    // Predicated region
    $region38: #{tpu_custom_call.1} parent=1 // pred_check
      _
    $region39: #{tpu_custom_call.1} parent=1 // pred_check_branch
      %214 = sbr.rel (0) target = $region41
    $region40: #{tpu_custom_call.1} parent=1 // pred_region
      %215 = dma.done [#allocation5], 256
    $region41: #{tpu_custom_call.1} parent=1 // pred_fallthru
      _
    %216 = vsyncpa [#allocation4], 1
    %217 = vsyncpa [#allocation7], 1
    %218 = vsyncpa [#allocation5], 1

</llo_original>
